<compile_context>
chip_gen: v7x
topology: tpu7x:2x2x1
jax: 0.10.0
libtpu: 0.0.40
codegen_flags: <defaults>
</compile_context>

<pallas_src>
import functools

import jax
import jax.numpy as jnp
from jax import lax
from jax.experimental import pallas as pl
from jax.experimental.pallas import tpu as pltpu

_REF_PRECISION = lax.Precision.HIGHEST   # only used by the pure-JAX reference


# ----------------------------------------------------------------------------- #
# Pallas kernel: Fourier features + 3-layer MLP, batch along the lane axis.
# ----------------------------------------------------------------------------- #
def fourier_hnn2_kernel(
    yt_ref,    # [8, TB]           y^T (rows 0..input_dim-1 real, rest zero), f32
    bft_ref,   # [n_fourier, 2]    B_Fourier^T, f32 (exact VPU Fourier projection)
    w1_ref,    # [hidden, 8+2nf]   column-reordered/padded W1, bf16
    b1_ref,    # [hidden, 1]       f32
    w2_ref,    # [hidden, hidden]  bf16
    b2_ref,    # [hidden, 1]       f32
    w3_ref,    # [8, hidden]       W3 in row 0, rows 1..7 zero, bf16
    out_ref,   # [8, TB]           Hamiltonian in row 0, f32
):
    yt = yt_ref[...]                                                   # [8, TB]

    # Fourier projection (K=2) on the VPU: exact f32, no MXU passes.
    f = bft_ref[:, 0:1] * yt[0:1, :] + bft_ref[:, 1:2] * yt[1:2, :]    # [nf, TB]

    # z^T = [y^T (8 rows), sin(f), cos(f)] -- all pieces sublane(8)-aligned.
    z = jnp.concatenate([yt, jnp.sin(f), jnp.cos(f)], axis=0)          # [8+2nf, TB]

    mm_dtype = w1_ref.dtype

    def mm(w_ref, x):
        # bf16 operands, f32 accumulation on the MXU (single pass per tile).
        return jnp.dot(w_ref[...], x.astype(mm_dtype),
                       preferred_element_type=jnp.float32)

    h = jnp.tanh(mm(w1_ref, z) + b1_ref[...])                          # [hidden, TB]
    h = jnp.tanh(mm(w2_ref, h) + b2_ref[...])                          # [hidden, TB]
    out_ref[...] = mm(w3_ref, h)                                       # [8, TB]


# ----------------------------------------------------------------------------- #
# One-time parameter preprocessing (hoisted out of the forward call).
# ----------------------------------------------------------------------------- #
def _round_up(x, m):
    return (x + m - 1) // m * m


def pack_params(B_Fourier, W1, b1, W2, b2, W3, *, input_dim, dtype=jnp.bfloat16):
    """Pre-transpose / reorder weights for the batch-in-lanes kernel.

    dtype=jnp.bfloat16 gives single-pass MXU matmuls (accumulation stays f32
    inside the kernel).  Biases and B_Fourier are kept f32.
    """
    n_fourier = B_Fourier.shape[1]
    hidden, mlp_in = W1.shape
    assert mlp_in == input_dim + 2 * n_fourier, "Forward_Inputs=True layout expected"

    pad_rows = _round_up(input_dim, 8)   # y rows padded to a full sublane group

    # W1 columns reordered/padded to match z^T = [y (pad_rows), sin (nf), cos (nf)].
    w1p = jnp.concatenate(
        [W1[:, :input_dim],
         jnp.zeros((hidden, pad_rows - input_dim), W1.dtype),
         W1[:, input_dim:]],
        axis=1).astype(dtype)                                   # [hidden, pad_rows+2nf]

    # W3 zero-padded to 8 output rows -> dense final matmul + dense store.
    w3p = jnp.zeros((8, hidden), dtype).at[0, :].set(W3[0, :].astype(dtype))

    return (
        B_Fourier.T.astype(jnp.float32),                        # [nf, 2]
        w1p,
        b1.reshape(hidden, 1).astype(jnp.float32),
        W2.astype(dtype),                                       # [hidden, hidden]
        b2.reshape(hidden, 1).astype(jnp.float32),
        w3p,                                                    # [8, hidden]
    )


# ----------------------------------------------------------------------------- #
# Forward wrapper.
# ----------------------------------------------------------------------------- #
@functools.partial(jax.jit, static_argnames=("block_cols",))
def _forward_impl(y, packed, *, block_cols):
    batch, input_dim = y.shape
    bft, w1p, b1c, w2, b2c, w3p = packed
    pad_rows = w1p.shape[1] - 2 * bft.shape[0]        # = 8 for input_dim=4
    batch_padded = _round_up(batch, block_cols)

    # Batch along lanes: y^T zero-padded to [pad_rows, batch_padded].
    yt = jnp.zeros((pad_rows, batch_padded), jnp.float32)
    yt = yt.at[:input_dim, :batch].set(y.T.astype(jnp.float32))

    grid = (batch_padded // block_cols,)
    resident = lambda i: (0, 0)       # weights stay in VMEM across grid steps

    out = pl.pallas_call(
        fourier_hnn2_kernel,
        out_shape=jax.ShapeDtypeStruct((8, batch_padded), jnp.float32),
        grid=grid,
        in_specs=[
            pl.BlockSpec((pad_rows, block_cols), lambda i: (0, i)),
            pl.BlockSpec(bft.shape, resident),
            pl.BlockSpec(w1p.shape, resident),
            pl.BlockSpec(b1c.shape, resident),
            pl.BlockSpec(w2.shape, resident),
            pl.BlockSpec(b2c.shape, resident),
            pl.BlockSpec(w3p.shape, resident),
        ],
        out_specs=pl.BlockSpec((8, block_cols), lambda i: (0, i)),
        compiler_params=pltpu.CompilerParams(
            dimension_semantics=("parallel",)),
    )(yt, bft, w1p, b1c, w2, b2c, w3p)

    return out[0, :batch].reshape(batch, 1)


def fourier_hnn2_forward(y, packed_params, *, max_block_cols=2048):
    """y: [batch, input_dim] -> hamiltonian [batch, 1]."""
    batch = y.shape[0]
    cols = _round_up(max(batch, 1), 128)
    if cols <= max_block_cols:
        block = cols                                   # single tile
    else:
        n_tiles = -(-cols // max_block_cols)
        if n_tiles % 2:                                # even tile count -> clean
            n_tiles += 1                               # 2-TensorCore split on v7x
        block = _round_up(-(-cols // n_tiles), 128)
    return _forward_impl(y, packed_params, block_cols=block)


# ----------------------------------------------------------------------------- #
# Deterministic parameter construction (mirrors FourierHNN2.__init__ shapes).
# ----------------------------------------------------------------------------- #
def _orthogonal(key, shape):
    rows, cols = shape
    n = max(rows, cols)
    a = jax.random.normal(key, (n, n), dtype=jnp.float32)
    q, r = jnp.linalg.qr(a)
    d = jnp.sign(jnp.diag(r))
    d = jnp.where(d == 0, 1.0, d)
    q = q * d[None, :]
    return q[:rows, :cols]


def build_params(key, input_dim, hidden_dim, n_fourier, forward_inputs=True):
    # TODO(synk): only the Forward_Inputs=True branch is implemented as a kernel.
    if forward_inputs:
        mlp_in = n_fourier * 2 + input_dim
    else:
        mlp_in = n_fourier * 2 + input_dim // 2
    k_bf, k1, k2, k3, kb1, kb2 = jax.random.split(key, 6)
    B_Fourier = jax.random.normal(k_bf, (2, n_fourier), dtype=jnp.float32)
    W1 = _orthogonal(k1, (hidden_dim, mlp_in))
    W2 = _orthogonal(k2, (hidden_dim, hidden_dim))
    W3 = _orthogonal(k3, (1, hidden_dim))
    b1 = jax.random.uniform(
        kb1, (hidden_dim,), dtype=jnp.float32,
        minval=-1.0 / jnp.sqrt(mlp_in), maxval=1.0 / jnp.sqrt(mlp_in))
    b2 = jax.random.uniform(
        kb2, (hidden_dim,), dtype=jnp.float32,
        minval=-1.0 / jnp.sqrt(hidden_dim), maxval=1.0 / jnp.sqrt(hidden_dim))
    return B_Fourier, W1, b1, W2, b2, W3


def reference_forward(y, B_Fourier, W1, b1, W2, b2, W3):
    # Pure-JAX f32 reference of the PyTorch forward (Forward_Inputs=True).
    f = jnp.dot(y[:, 0:2], B_Fourier, precision=_REF_PRECISION)
    z = jnp.concatenate([y, jnp.sin(f), jnp.cos(f)], axis=1)
    h = jnp.tanh(jnp.dot(z, W1.T, precision=_REF_PRECISION) + b1)
    h = jnp.tanh(jnp.dot(h, W2.T, precision=_REF_PRECISION) + b2)
    return jnp.dot(h, W3.T, precision=_REF_PRECISION)


# TODO(synk): time_derivative() uses torch.autograd.grad + the symplectic matrix M;
# in JAX it is obtained via jax.grad of this forward — not implemented as a kernel.

if __name__ == "__main__":
    input_dim = 4        # double pendulum: (q1, q2, p1, p2)
    hidden_dim = 32
    n_fourier = 16

    key = jax.random.PRNGKey(0)
    k_params, k_y1, k_y2 = jax.random.split(key, 3)
    B_Fourier, W1, b1, W2, b2, W3 = build_params(
        k_params, input_dim, hidden_dim, n_fourier, forward_inputs=True)

    # One-time weight preprocessing: bf16 MXU operands, f32 biases / Fourier.
    packed = pack_params(B_Fourier, W1, b1, W2, b2, W3,
                         input_dim=input_dim, dtype=jnp.bfloat16)
    packed = jax.block_until_ready(packed)

    # bf16 matmul operands (f32 accumulation) vs the f32/HIGHEST reference ->
    # relaxed tolerance (per review).  Fourier features themselves are exact f32.
    tol = dict(atol=5e-2, rtol=5e-2)

    # Small single-tile check.
    y_small = jax.random.normal(k_y1, (8, input_dim), dtype=jnp.float32)
    h_small = jax.block_until_ready(fourier_hnn2_forward(y_small, packed))
    assert h_small.ndim == 2 and h_small.shape == (8, 1), h_small.shape
    ref_small = reference_forward(y_small, B_Fourier, W1, b1, W2, b2, W3)
    assert jnp.allclose(h_small, ref_small, **tol), (
        "small-batch mismatch vs JAX reference")

    # Ragged multi-tile check (exercises padding, resident weights, the
    # software-pipelined parallel grid and the even-tile-count split).
    y_big = jax.random.normal(k_y2, (1000, input_dim), dtype=jnp.float32)
    h_big = jax.block_until_ready(
        fourier_hnn2_forward(y_big, packed, max_block_cols=256))
    assert h_big.shape == (1000, 1), h_big.shape
    ref_big = reference_forward(y_big, B_Fourier, W1, b1, W2, b2, W3)
    assert jnp.allclose(h_big, ref_big, **tol), (
        "large-batch mismatch vs JAX reference")

    print("KERNEL_OK")
</pallas_src>

<mosaic_0001>
module attributes {stable_mosaic.version = 11 : i64} {
  func.func @fourier_hnn2_kernel(%arg0: i32, %arg1: memref<8x128xf32, #tpu.memory_space<vmem>>, %arg2: memref<16x2xf32, #tpu.memory_space<vmem>>, %arg3: memref<32x40xbf16, #tpu.memory_space<vmem>>, %arg4: memref<32x1xf32, #tpu.memory_space<vmem>>, %arg5: memref<32x32xbf16, #tpu.memory_space<vmem>>, %arg6: memref<32x1xf32, #tpu.memory_space<vmem>>, %arg7: memref<8x32xbf16, #tpu.memory_space<vmem>>, %arg8: memref<8x128xf32, #tpu.memory_space<vmem>>) attributes {dimension_semantics = [#tpu.dimension_semantics<parallel>], iteration_bounds = array<i64: 1>, scalar_prefetch = 0 : i64, scratch_operands = 0 : i64, tpu.core_type = #tpu.core_type<tc>, window_params = [{transform_indices = @transform_0, window_bounds = array<i64: 8, 128>}, {pipeline_mode = #tpu.pipeline_mode<synchronous>, transform_indices = @transform_1, window_bounds = array<i64: 16, 2>}, {pipeline_mode = #tpu.pipeline_mode<synchronous>, transform_indices = @transform_2, window_bounds = array<i64: 32, 40>}, {pipeline_mode = #tpu.pipeline_mode<synchronous>, transform_indices = @transform_3, window_bounds = array<i64: 32, 1>}, {pipeline_mode = #tpu.pipeline_mode<synchronous>, transform_indices = @transform_4, window_bounds = array<i64: 32, 32>}, {pipeline_mode = #tpu.pipeline_mode<synchronous>, transform_indices = @transform_5, window_bounds = array<i64: 32, 1>}, {pipeline_mode = #tpu.pipeline_mode<synchronous>, transform_indices = @transform_6, window_bounds = array<i64: 8, 32>}, {transform_indices = @transform_7, window_bounds = array<i64: 8, 128>}]} {
    %c0 = arith.constant 0 : index
    %c0_0 = arith.constant 0 : index
    %0 = vector.load %arg1[%c0, %c0_0] : memref<8x128xf32, #tpu.memory_space<vmem>>, vector<8x128xf32>
    %c0_1 = arith.constant 0 : index
    %c0_2 = arith.constant 0 : index
    %1 = vector.load %arg2[%c0_1, %c0_2] : memref<16x2xf32, #tpu.memory_space<vmem>>, vector<16x1xf32>
    %2 = vector.extract_strided_slice %0 {offsets = [0, 0], sizes = [1, 128], strides = [1, 1]} : vector<8x128xf32> to vector<1x128xf32>
    %3 = vector.broadcast %1 : vector<16x1xf32> to vector<16x128xf32>
    %4 = vector.broadcast %2 : vector<1x128xf32> to vector<16x128xf32>
    %5 = arith.mulf %3, %4 : vector<16x128xf32>
    %c0_3 = arith.constant 0 : index
    %c1 = arith.constant 1 : index
    %6 = vector.load %arg2[%c0_3, %c1] : memref<16x2xf32, #tpu.memory_space<vmem>>, vector<16x1xf32>
    %7 = vector.extract_strided_slice %0 {offsets = [1, 0], sizes = [1, 128], strides = [1, 1]} : vector<8x128xf32> to vector<1x128xf32>
    %8 = vector.broadcast %6 : vector<16x1xf32> to vector<16x128xf32>
    %9 = vector.broadcast %7 : vector<1x128xf32> to vector<16x128xf32>
    %10 = arith.mulf %8, %9 : vector<16x128xf32>
    %11 = arith.addf %5, %10 : vector<16x128xf32>
    %12 = math.sin %11 : vector<16x128xf32>
    %13 = math.cos %11 : vector<16x128xf32>
    %14 = tpu.concatenate %0, %12, %13 in 0 : vector<8x128xf32>, vector<16x128xf32>, vector<16x128xf32> -> vector<40x128xf32>
    %c0_4 = arith.constant 0 : index
    %c0_5 = arith.constant 0 : index
    %15 = vector.load %arg3[%c0_4, %c0_5] : memref<32x40xbf16, #tpu.memory_space<vmem>>, vector<32x40xbf16>
    %16 = arith.truncf %14 : vector<40x128xf32> to vector<40x128xbf16>
    %cst = arith.constant dense<0.000000e+00> : vector<32x128xf32>
    %17 = tpu.matmul %15, %16, %cst {dimension_numbers = #tpu.dot_dimension_numbers<[1], [0], [0], [1], [0, 0, 1, 1], [], []>} : vector<32x40xbf16>, vector<40x128xbf16>, vector<32x128xf32> -> vector<32x128xf32>
    %c0_6 = arith.constant 0 : index
    %c0_7 = arith.constant 0 : index
    %18 = vector.load %arg4[%c0_6, %c0_7] : memref<32x1xf32, #tpu.memory_space<vmem>>, vector<32x1xf32>
    %19 = vector.broadcast %18 : vector<32x1xf32> to vector<32x128xf32>
    %20 = arith.addf %17, %19 : vector<32x128xf32>
    %21 = math.tanh %20 : vector<32x128xf32>
    %c0_8 = arith.constant 0 : index
    %c0_9 = arith.constant 0 : index
    %22 = vector.load %arg5[%c0_8, %c0_9] : memref<32x32xbf16, #tpu.memory_space<vmem>>, vector<32x32xbf16>
    %23 = arith.truncf %21 : vector<32x128xf32> to vector<32x128xbf16>
    %cst_10 = arith.constant dense<0.000000e+00> : vector<32x128xf32>
    %24 = tpu.matmul %22, %23, %cst_10 {dimension_numbers = #tpu.dot_dimension_numbers<[1], [0], [0], [1], [0, 0, 1, 1], [], []>} : vector<32x32xbf16>, vector<32x128xbf16>, vector<32x128xf32> -> vector<32x128xf32>
    %c0_11 = arith.constant 0 : index
    %c0_12 = arith.constant 0 : index
    %25 = vector.load %arg6[%c0_11, %c0_12] : memref<32x1xf32, #tpu.memory_space<vmem>>, vector<32x1xf32>
    %26 = vector.broadcast %25 : vector<32x1xf32> to vector<32x128xf32>
    %27 = arith.addf %24, %26 : vector<32x128xf32>
    %28 = math.tanh %27 : vector<32x128xf32>
    %c0_13 = arith.constant 0 : index
    %c0_14 = arith.constant 0 : index
    %29 = vector.load %arg7[%c0_13, %c0_14] : memref<8x32xbf16, #tpu.memory_space<vmem>>, vector<8x32xbf16>
    %30 = arith.truncf %28 : vector<32x128xf32> to vector<32x128xbf16>
    %cst_15 = arith.constant dense<0.000000e+00> : vector<8x128xf32>
    %31 = tpu.matmul %29, %30, %cst_15 {dimension_numbers = #tpu.dot_dimension_numbers<[1], [0], [0], [1], [0, 0, 1, 1], [], []>} : vector<8x32xbf16>, vector<32x128xbf16>, vector<8x128xf32> -> vector<8x128xf32>
    %c0_16 = arith.constant 0 : index
    %c0_17 = arith.constant 0 : index
    %32 = vector.load %arg8[%c0_16, %c0_17] : memref<8x128xf32, #tpu.memory_space<vmem>>, vector<8x128xf32>
    tpu.vector_store %arg8[%c0_16, %c0_17], %31 {strides = array<i32>} : memref<8x128xf32, #tpu.memory_space<vmem>>, vector<8x128xf32>,
    return
  }
  func.func @transform_0(%arg0: i32) -> (i32, i32) {
    %c0_i32 = arith.constant 0 : i32
    %c0_i32_0 = arith.constant 0 : i32
    return %c0_i32, %arg0 : i32, i32
  }
  func.func @transform_1(%arg0: i32) -> (i32, i32) {
    %c0_i32 = arith.constant 0 : i32
    %c0_i32_0 = arith.constant 0 : i32
    %c0_i32_1 = arith.constant 0 : i32
    return %c0_i32, %c0_i32_0 : i32, i32
  }
  func.func @transform_2(%arg0: i32) -> (i32, i32) {
    %c0_i32 = arith.constant 0 : i32
    %c0_i32_0 = arith.constant 0 : i32
    %c0_i32_1 = arith.constant 0 : i32
    return %c0_i32, %c0_i32_0 : i32, i32
  }
  func.func @transform_3(%arg0: i32) -> (i32, i32) {
    %c0_i32 = arith.constant 0 : i32
    %c0_i32_0 = arith.constant 0 : i32
    %c0_i32_1 = arith.constant 0 : i32
    return %c0_i32, %c0_i32_0 : i32, i32
  }
  func.func @transform_4(%arg0: i32) -> (i32, i32) {
    %c0_i32 = arith.constant 0 : i32
    %c0_i32_0 = arith.constant 0 : i32
    %c0_i32_1 = arith.constant 0 : i32
    return %c0_i32, %c0_i32_0 : i32, i32
  }
  func.func @transform_5(%arg0: i32) -> (i32, i32) {
    %c0_i32 = arith.constant 0 : i32
    %c0_i32_0 = arith.constant 0 : i32
    %c0_i32_1 = arith.constant 0 : i32
    return %c0_i32, %c0_i32_0 : i32, i32
  }
  func.func @transform_6(%arg0: i32) -> (i32, i32) {
    %c0_i32 = arith.constant 0 : i32
    %c0_i32_0 = arith.constant 0 : i32
    %c0_i32_1 = arith.constant 0 : i32
    return %c0_i32, %c0_i32_0 : i32, i32
  }
  func.func @transform_7(%arg0: i32) -> (i32, i32) {
    %c0_i32 = arith.constant 0 : i32
    %c0_i32_0 = arith.constant 0 : i32
    return %c0_i32, %arg0 : i32, i32
  }
}

</mosaic_0001>

<llo_original>
// kernel: _forward_impl.1
$region0: #{_forward_impl.1}
  #allocation0 [shape = 'u32[]', space=smem, size = 0x4, offset = 0x4, fixed_abs, tag = 'smem constant byte address 0x4 - core index']
  #allocation1 [shape = 'u32[144,128]{1,0:T(1,128)}', space=vmem, size = 0x12000, scoped, tag = 'internal scratch']
  %s0 = inlined_call_operand.vmem [shape: f32[8,128], index: 0, kind: input, shape index: {}]
  %s1 = inlined_call_operand.vmem [shape: f32[16,2], index: 1, kind: input, shape index: {}]
  %s2 = inlined_call_operand.vmem [shape: bf16[32,40], index: 2, kind: input, shape index: {}]
  %s3 = inlined_call_operand.vmem [shape: f32[32,1], index: 3, kind: input, shape index: {}]
  %s4 = inlined_call_operand.vmem [shape: bf16[32,32], index: 4, kind: input, shape index: {}]
  %s5 = inlined_call_operand.vmem [shape: f32[32,1], index: 5, kind: input, shape index: {}]
  %s6 = inlined_call_operand.vmem [shape: bf16[8,32], index: 6, kind: input, shape index: {}]
  %s7 = inlined_call_operand.vmem [shape: f32[8,128], index: 7, kind: output, shape index: {}]
  %s8 = sld [smem:[#allocation0]]
  $region38: #{_forward_impl.1} parent=0
    _
  %s10 = ssub.s32 1, %s8
  %s11 = scalar_select 0, %s10, %s8
  // Predicated region
  $region2: #{_forward_impl.1} parent=0 // pred_check
    _
  $region3: #{_forward_impl.1} parent=0 // pred_check_branch
    %13 = sbr.rel (0) target = $region5
  $region4: #{_forward_impl.1} parent=0 // pred_region
    _
  $region5: #{_forward_impl.1} parent=0 // pred_fallthru
    _
  // Predicated region
  $region6: #{_forward_impl.1} parent=0 // pred_check
    _
  $region7: #{_forward_impl.1} parent=0 // pred_check_branch
    %15 = sbr.rel (0) target = $region9
  $region8: #{_forward_impl.1} parent=0 // pred_region
    _
  $region9: #{_forward_impl.1} parent=0 // pred_fallthru
    _
  // Predicated region
  $region10: #{_forward_impl.1} parent=0 // pred_check
    _
  $region11: #{_forward_impl.1} parent=0 // pred_check_branch
    %17 = sbr.rel (0) target = $region13
  $region12: #{_forward_impl.1} parent=0 // pred_region
    _
  $region13: #{_forward_impl.1} parent=0 // pred_fallthru
    _
  // Predicated region
  $region14: #{_forward_impl.1} parent=0 // pred_check
    _
  $region15: #{_forward_impl.1} parent=0 // pred_check_branch
    %19 = sbr.rel (0) target = $region17
  $region16: #{_forward_impl.1} parent=0 // pred_region
    _
  $region17: #{_forward_impl.1} parent=0 // pred_fallthru
    _
  // Predicated region
  $region18: #{_forward_impl.1} parent=0 // pred_check
    _
  $region19: #{_forward_impl.1} parent=0 // pred_check_branch
    %21 = sbr.rel (0) target = $region21
  $region20: #{_forward_impl.1} parent=0 // pred_region
    _
  $region21: #{_forward_impl.1} parent=0 // pred_fallthru
    _
  // Predicated region
  $region22: #{_forward_impl.1} parent=0 // pred_check
    _
  $region23: #{_forward_impl.1} parent=0 // pred_check_branch
    %23 = sbr.rel (0) target = $region25
  $region24: #{_forward_impl.1} parent=0 // pred_region
    _
  $region25: #{_forward_impl.1} parent=0 // pred_fallthru
    _
  // Predicated region
  $region26: #{_forward_impl.1} parent=0 // pred_check
    _
  $region27: #{_forward_impl.1} parent=0 // pred_check_branch
    %25 = sbr.rel (0) target = $region29
  $region28: #{_forward_impl.1} parent=0 // pred_region
    _
  $region29: #{_forward_impl.1} parent=0 // pred_fallthru
    _
  %v27 = vld [vmem:[%s0] sm:$0xff]
  %v28 = vld [vmem:[%s1] sm:$0xff]
  %v29 = vld [vmem:[%s1 + $0x8] sm:$0xff]
  %31 = vset.pattern.permute.xlu0 0
  %32 = vperm.xlu0 %31, %v28
  %v33 = vpop.permute.xlu0 %32
  %36 = vset.pattern.permute.xlu0 0
  %37 = vperm.xlu0 %36, %v29
  %v38 = vpop.permute.xlu0 %37
  %v40 = vlaneseq
  %v41 = vshrl.u32 %v40, 7
  %v42 = vsub.s32 0, %v41
  %v43 = vrot.slane %v27, %v42
  %v44 = vmul.f32 %v33, %v43
  %v45 = vmul.f32 %v38, %v43
  %46 = vset.pattern.permute.xlu0 1
  %47 = vperm.xlu0 %46, %v28
  %v48 = vpop.permute.xlu0 %47
  %50 = vset.pattern.permute.xlu0 1
  %51 = vperm.xlu0 %50, %v29
  %v52 = vpop.permute.xlu0 %51
  %v54 = vlaneseq
  %v55 = vshrl.u32 %v54, 7
  %v56 = vsub.s32 1, %v55
  %v57 = vrot.slane %v27, %v56
  %v58 = vmul.f32 %v48, %v57
  %v59 = vmul.f32 %v52, %v57
  %v60 = vadd.f32 %v44, %v58
  %v61 = vadd.f32 %v45, %v59
  %v62 = vand.u32 2147483647, %v60
  %vm63 = vcmp.le.f32.partialorder %v62, 0.7853982
  %vm64 = vcmp.lt.s32.totalorder %v60, 0
  %v65 = vand.u32 %v60, 2139095040
  %v66 = vshrl.u32 %v65, 23
  %v67 = vsub.s32 %v66, 127
  %v68 = vand.u32 2147483647, %v60
  %v69 = vand.u32 %v68, 8388607
  %v70 = vor.u32 %v69, 8388608
  %v71 = vsub.s32 0, %v70
  %v72 = vadd.s32 %v67, 1
  %vm73 = vcmp.gt.s32.totalorder %v72, 0
  %v74 = vsel %vm73, %v72, 0
  %v75 = vshrl.u32 %v74, 5
  %v76 = vand.u32 %v74, 31
  %v77 = vsub.s32 32, %v76
  %v78 = vshrl.u32 683565275, %v77
  %v79 = vshll.u32 683565275, %v76
  %v80 = vshrl.u32 2475754826, %v77
  %v81 = vor.u32 %v79, %v80
  %v82 = vshll.u32 2475754826, %v76
  %v83 = vshrl.u32 2131351028, %v77
  %v84 = vor.u32 %v82, %v83
  %v85 = vshll.u32 2131351028, %v76
  %v86 = vshrl.u32 2102212464, %v77
  %v87 = vor.u32 %v85, %v86
  %v88 = vshll.u32 2102212464, %v76
  %v89 = vshrl.u32 920167782, %v77
  %v90 = vor.u32 %v88, %v89
  %v91 = vshll.u32 920167782, %v76
  %v92 = vshrl.u32 1326507024, %v77
  %v93 = vor.u32 %v91, %v92
  %vm94 = vcmp.lt.s32.totalorder %v75, 1
  %vm95 = vcmp.lt.s32.totalorder %v75, 2
  %vm96 = vcmp.lt.s32.totalorder %v75, 3
  %vm97 = vcmp.lt.s32.totalorder %v75, 4
  %v98 = vsel %vm94, %v78, %v81
  %v99 = vsel %vm97, %v87, 2102212464
  %v100 = vsel %vm96, %v84, %v99
  %v101 = vsel %vm95, %v98, %v100
  %v102 = vsel %vm94, %v81, %v84
  %v103 = vsel %vm97, %v90, 920167782
  %v104 = vsel %vm96, %v87, %v103
  %v105 = vsel %vm95, %v102, %v104
  %v106 = vsel %vm94, %v84, %v87
  %v107 = vsel %vm97, %v93, 1326507024
  %v108 = vsel %vm96, %v90, %v107
  %v109 = vsel %vm95, %v106, %v108
  %v110 = vshll.u32 %v70, 8
  %v111 = vmul.u32.u64.compose %v110, %v109
  %v112 = vextract.low.u32 %v111
  %v113 = vextract.high.u32 %v111
  %v114 = vmul.u32.u64.compose %v110, %v105
  %v115 = vextract.low.u32 %v114
  %v116 = vextract.high.u32 %v114
  %v117 = vmul.u32 %v110, %v101
  %v118 = vadd.s32 %v113, %v115
  %vm119 = vc.u32 %v113, %v115
  %v120 = vadd.s32 %v116, 1
  %v121 = vsel %vm119, %v120, %v116
  %v122 = vadd.s32 %v117, %v121
  %v123 = vadd.s32 %v122, 536870912
  %v124 = vshrl.u32 %v123, 30
  %v125 = vshll.u32 %v124, 30
  %v126 = vsub.s32 %v122, %v125
  %vm127 = vcmp.lt.s32.totalorder %v126, 0
  %v128 = vsub.s32 0, %v126
  %v129 = vsel %vm127, %v128, %v126
  %v130 = vclz %v129
  %v131 = vsub.s32 %v130, 2
  %vm132 = vcmp.gt.s32.totalorder 0, %v131
  %v133 = vsel %vm132, 0, %v131
  %v134 = vsub.s32 32, %v133
  %v135 = vshll.u32 %v126, %v133
  %v136 = vshrl.u32 %v118, %v134
  %v137 = vor.u32 %v135, %v136
  %v138 = vsub.s32 4294967266, %v133
  %v139 = vadd.s32 %v138, 127
  %v140 = vshll.u32 %v139, 23
  %v141 = vor.u32 4788187, %v140
  %v142 = vand.u32 2147483647, %v141
  %v144 = vcvt.s32.f32 %v137
  %v145 = vmul.f32 %v144, %v142
  %v146 = vxor.u32 %v145, 2147483648
  %v147 = vsel %vm64, %v146, %v145
  %v148 = vsub.s32 4, %v124
  %v149 = vsel %vm64, %v148, %v124
  %v150 = vsel %vm63, %v60, %v147
  %v151 = vsel %vm63, 0, %v149
  %v152 = vcosq.f32.pop %v150
  %v153 = vsinq.f32.pop %v150
  %vm154 = vweird.f32 %v60
  %v155 = vadd.s32 %v151, 3
  %v156 = vand.u32 %v155, 3
  %vm157 = vcmp.lt.s32.totalorder %v156, 2
  %vm158 = vcmp.eq.s32.totalorder %v156, 0
  %v159 = vxor.u32 %v153, 2147483648
  %v160 = vsel %vm158, %v152, %v159
  %vm161 = vcmp.eq.s32.totalorder %v156, 2
  %v162 = vxor.u32 %v152, 2147483648
  %v163 = vsel %vm161, %v162, %v153
  %v164 = vsel %vm157, %v160, %v163
  %v165 = vsel %vm154, nan, %v164
  %v166 = vand.u32 2147483647, %v61
  %vm167 = vcmp.le.f32.partialorder %v166, 0.7853982
  %vm168 = vcmp.lt.s32.totalorder %v61, 0
  %v169 = vand.u32 %v61, 2139095040
  %v170 = vshrl.u32 %v169, 23
  %v171 = vsub.s32 %v170, 127
  %v172 = vand.u32 2147483647, %v61
  %v173 = vand.u32 %v172, 8388607
  %v174 = vor.u32 %v173, 8388608
  %v175 = vsub.s32 0, %v174
  %v176 = vadd.s32 %v171, 1
  %vm177 = vcmp.gt.s32.totalorder %v176, 0
  %v178 = vsel %vm177, %v176, 0
  %v179 = vshrl.u32 %v178, 5
  %v180 = vand.u32 %v178, 31
  %v181 = vsub.s32 32, %v180
  %v182 = vshrl.u32 683565275, %v181
  %v183 = vshll.u32 683565275, %v180
  %v184 = vshrl.u32 2475754826, %v181
  %v185 = vor.u32 %v183, %v184
  %v186 = vshll.u32 2475754826, %v180
  %v187 = vshrl.u32 2131351028, %v181
  %v188 = vor.u32 %v186, %v187
  %v189 = vshll.u32 2131351028, %v180
  %v190 = vshrl.u32 2102212464, %v181
  %v191 = vor.u32 %v189, %v190
  %v192 = vshll.u32 2102212464, %v180
  %v193 = vshrl.u32 920167782, %v181
  %v194 = vor.u32 %v192, %v193
  %v195 = vshll.u32 920167782, %v180
  %v196 = vshrl.u32 1326507024, %v181
  %v197 = vor.u32 %v195, %v196
  %vm198 = vcmp.lt.s32.totalorder %v179, 1
  %vm199 = vcmp.lt.s32.totalorder %v179, 2
  %vm200 = vcmp.lt.s32.totalorder %v179, 3
  %vm201 = vcmp.lt.s32.totalorder %v179, 4
  %v202 = vsel %vm198, %v182, %v185
  %v203 = vsel %vm201, %v191, 2102212464
  %v204 = vsel %vm200, %v188, %v203
  %v205 = vsel %vm199, %v202, %v204
  %v206 = vsel %vm198, %v185, %v188
  %v207 = vsel %vm201, %v194, 920167782
  %v208 = vsel %vm200, %v191, %v207
  %v209 = vsel %vm199, %v206, %v208
  %v210 = vsel %vm198, %v188, %v191
  %v211 = vsel %vm201, %v197, 1326507024
  %v212 = vsel %vm200, %v194, %v211
  %v213 = vsel %vm199, %v210, %v212
  %v214 = vshll.u32 %v174, 8
  %v215 = vmul.u32.u64.compose %v214, %v213
  %v216 = vextract.low.u32 %v215
  %v217 = vextract.high.u32 %v215
  %v218 = vmul.u32.u64.compose %v214, %v209
  %v219 = vextract.low.u32 %v218
  %v220 = vextract.high.u32 %v218
  %v221 = vmul.u32 %v214, %v205
  %v222 = vadd.s32 %v217, %v219
  %vm223 = vc.u32 %v217, %v219
  %v224 = vadd.s32 %v220, 1
  %v225 = vsel %vm223, %v224, %v220
  %v226 = vadd.s32 %v221, %v225
  %v227 = vadd.s32 %v226, 536870912
  %v228 = vshrl.u32 %v227, 30
  %v229 = vshll.u32 %v228, 30
  %v230 = vsub.s32 %v226, %v229
  %vm231 = vcmp.lt.s32.totalorder %v230, 0
  %v232 = vsub.s32 0, %v230
  %v233 = vsel %vm231, %v232, %v230
  %v234 = vclz %v233
  %v235 = vsub.s32 %v234, 2
  %vm236 = vcmp.gt.s32.totalorder 0, %v235
  %v237 = vsel %vm236, 0, %v235
  %v238 = vsub.s32 32, %v237
  %v239 = vshll.u32 %v230, %v237
  %v240 = vshrl.u32 %v222, %v238
  %v241 = vor.u32 %v239, %v240
  %v242 = vsub.s32 4294967266, %v237
  %v243 = vadd.s32 %v242, 127
  %v244 = vshll.u32 %v243, 23
  %v245 = vor.u32 4788187, %v244
  %v246 = vand.u32 2147483647, %v245
  %v248 = vcvt.s32.f32 %v241
  %v249 = vmul.f32 %v248, %v246
  %v250 = vxor.u32 %v249, 2147483648
  %v251 = vsel %vm168, %v250, %v249
  %v252 = vsub.s32 4, %v228
  %v253 = vsel %vm168, %v252, %v228
  %v254 = vsel %vm167, %v61, %v251
  %v255 = vsel %vm167, 0, %v253
  %v256 = vcosq.f32.pop %v254
  %v257 = vsinq.f32.pop %v254
  %vm258 = vweird.f32 %v61
  %v259 = vadd.s32 %v255, 3
  %v260 = vand.u32 %v259, 3
  %vm261 = vcmp.lt.s32.totalorder %v260, 2
  %vm262 = vcmp.eq.s32.totalorder %v260, 0
  %v263 = vxor.u32 %v257, 2147483648
  %v264 = vsel %vm262, %v256, %v263
  %vm265 = vcmp.eq.s32.totalorder %v260, 2
  %v266 = vxor.u32 %v256, 2147483648
  %v267 = vsel %vm265, %v266, %v257
  %v268 = vsel %vm261, %v264, %v267
  %v269 = vsel %vm258, nan, %v268
  %v270 = vand.u32 2147483647, %v60
  %vm271 = vcmp.le.f32.partialorder %v270, 0.7853982
  %vm272 = vcmp.lt.s32.totalorder %v60, 0
  %v273 = vand.u32 %v60, 2139095040
  %v274 = vshrl.u32 %v273, 23
  %v275 = vsub.s32 %v274, 127
  %v276 = vand.u32 2147483647, %v60
  %v277 = vand.u32 %v276, 8388607
  %v278 = vor.u32 %v277, 8388608
  %v279 = vsub.s32 0, %v278
  %v280 = vadd.s32 %v275, 1
  %vm281 = vcmp.gt.s32.totalorder %v280, 0
  %v282 = vsel %vm281, %v280, 0
  %v283 = vshrl.u32 %v282, 5
  %v284 = vand.u32 %v282, 31
  %v285 = vsub.s32 32, %v284
  %v286 = vshrl.u32 683565275, %v285
  %v287 = vshll.u32 683565275, %v284
  %v288 = vshrl.u32 2475754826, %v285
  %v289 = vor.u32 %v287, %v288
  %v290 = vshll.u32 2475754826, %v284
  %v291 = vshrl.u32 2131351028, %v285
  %v292 = vor.u32 %v290, %v291
  %v293 = vshll.u32 2131351028, %v284
  %v294 = vshrl.u32 2102212464, %v285
  %v295 = vor.u32 %v293, %v294
  %v296 = vshll.u32 2102212464, %v284
  %v297 = vshrl.u32 920167782, %v285
  %v298 = vor.u32 %v296, %v297
  %v299 = vshll.u32 920167782, %v284
  %v300 = vshrl.u32 1326507024, %v285
  %v301 = vor.u32 %v299, %v300
  %vm302 = vcmp.lt.s32.totalorder %v283, 1
  %vm303 = vcmp.lt.s32.totalorder %v283, 2
  %vm304 = vcmp.lt.s32.totalorder %v283, 3
  %vm305 = vcmp.lt.s32.totalorder %v283, 4
  %v306 = vsel %vm302, %v286, %v289
  %v307 = vsel %vm305, %v295, 2102212464
  %v308 = vsel %vm304, %v292, %v307
  %v309 = vsel %vm303, %v306, %v308
  %v310 = vsel %vm302, %v289, %v292
  %v311 = vsel %vm305, %v298, 920167782
  %v312 = vsel %vm304, %v295, %v311
  %v313 = vsel %vm303, %v310, %v312
  %v314 = vsel %vm302, %v292, %v295
  %v315 = vsel %vm305, %v301, 1326507024
  %v316 = vsel %vm304, %v298, %v315
  %v317 = vsel %vm303, %v314, %v316
  %v318 = vshll.u32 %v278, 8
  %v319 = vmul.u32.u64.compose %v318, %v317
  %v320 = vextract.low.u32 %v319
  %v321 = vextract.high.u32 %v319
  %v322 = vmul.u32.u64.compose %v318, %v313
  %v323 = vextract.low.u32 %v322
  %v324 = vextract.high.u32 %v322
  %v325 = vmul.u32 %v318, %v309
  %v326 = vadd.s32 %v321, %v323
  %vm327 = vc.u32 %v321, %v323
  %v328 = vadd.s32 %v324, 1
  %v329 = vsel %vm327, %v328, %v324
  %v330 = vadd.s32 %v325, %v329
  %v331 = vadd.s32 %v330, 536870912
  %v332 = vshrl.u32 %v331, 30
  %v333 = vshll.u32 %v332, 30
  %v334 = vsub.s32 %v330, %v333
  %vm335 = vcmp.lt.s32.totalorder %v334, 0
  %v336 = vsub.s32 0, %v334
  %v337 = vsel %vm335, %v336, %v334
  %v338 = vclz %v337
  %v339 = vsub.s32 %v338, 2
  %vm340 = vcmp.gt.s32.totalorder 0, %v339
  %v341 = vsel %vm340, 0, %v339
  %v342 = vsub.s32 32, %v341
  %v343 = vshll.u32 %v334, %v341
  %v344 = vshrl.u32 %v326, %v342
  %v345 = vor.u32 %v343, %v344
  %v346 = vsub.s32 4294967266, %v341
  %v347 = vadd.s32 %v346, 127
  %v348 = vshll.u32 %v347, 23
  %v349 = vor.u32 4788187, %v348
  %v350 = vand.u32 2147483647, %v349
  %v352 = vcvt.s32.f32 %v345
  %v353 = vmul.f32 %v352, %v350
  %v354 = vxor.u32 %v353, 2147483648
  %v355 = vsel %vm272, %v354, %v353
  %v356 = vsub.s32 4, %v332
  %v357 = vsel %vm272, %v356, %v332
  %v358 = vsel %vm271, %v60, %v355
  %v359 = vsel %vm271, 0, %v357
  %v360 = vcosq.f32.pop %v358
  %v361 = vsinq.f32.pop %v358
  %vm362 = vweird.f32 %v60
  %v363 = vand.u32 %v359, 3
  %vm364 = vcmp.lt.s32.totalorder %v363, 2
  %vm365 = vcmp.eq.s32.totalorder %v363, 0
  %v366 = vxor.u32 %v361, 2147483648
  %v367 = vsel %vm365, %v360, %v366
  %vm368 = vcmp.eq.s32.totalorder %v363, 2
  %v369 = vxor.u32 %v360, 2147483648
  %v370 = vsel %vm368, %v369, %v361
  %v371 = vsel %vm364, %v367, %v370
  %v372 = vsel %vm362, nan, %v371
  %v373 = vand.u32 2147483647, %v61
  %vm374 = vcmp.le.f32.partialorder %v373, 0.7853982
  %vm375 = vcmp.lt.s32.totalorder %v61, 0
  %v376 = vand.u32 %v61, 2139095040
  %v377 = vshrl.u32 %v376, 23
  %v378 = vsub.s32 %v377, 127
  %v379 = vand.u32 2147483647, %v61
  %v380 = vand.u32 %v379, 8388607
  %v381 = vor.u32 %v380, 8388608
  %v382 = vsub.s32 0, %v381
  %v383 = vadd.s32 %v378, 1
  %vm384 = vcmp.gt.s32.totalorder %v383, 0
  %v385 = vsel %vm384, %v383, 0
  %v386 = vshrl.u32 %v385, 5
  %v387 = vand.u32 %v385, 31
  %v388 = vsub.s32 32, %v387
  %v389 = vshrl.u32 683565275, %v388
  %v390 = vshll.u32 683565275, %v387
  %v391 = vshrl.u32 2475754826, %v388
  %v392 = vor.u32 %v390, %v391
  %v393 = vshll.u32 2475754826, %v387
  %v394 = vshrl.u32 2131351028, %v388
  %v395 = vor.u32 %v393, %v394
  %v396 = vshll.u32 2131351028, %v387
  %v397 = vshrl.u32 2102212464, %v388
  %v398 = vor.u32 %v396, %v397
  %v399 = vshll.u32 2102212464, %v387
  %v400 = vshrl.u32 920167782, %v388
  %v401 = vor.u32 %v399, %v400
  %v402 = vshll.u32 920167782, %v387
  %v403 = vshrl.u32 1326507024, %v388
  %v404 = vor.u32 %v402, %v403
  %vm405 = vcmp.lt.s32.totalorder %v386, 1
  %vm406 = vcmp.lt.s32.totalorder %v386, 2
  %vm407 = vcmp.lt.s32.totalorder %v386, 3
  %vm408 = vcmp.lt.s32.totalorder %v386, 4
  %v409 = vsel %vm405, %v389, %v392
  %v410 = vsel %vm408, %v398, 2102212464
  %v411 = vsel %vm407, %v395, %v410
  %v412 = vsel %vm406, %v409, %v411
  %v413 = vsel %vm405, %v392, %v395
  %v414 = vsel %vm408, %v401, 920167782
  %v415 = vsel %vm407, %v398, %v414
  %v416 = vsel %vm406, %v413, %v415
  %v417 = vsel %vm405, %v395, %v398
  %v418 = vsel %vm408, %v404, 1326507024
  %v419 = vsel %vm407, %v401, %v418
  %v420 = vsel %vm406, %v417, %v419
  %v421 = vshll.u32 %v381, 8
  %v422 = vmul.u32.u64.compose %v421, %v420
  %v423 = vextract.low.u32 %v422
  %v424 = vextract.high.u32 %v422
  %v425 = vmul.u32.u64.compose %v421, %v416
  %v426 = vextract.low.u32 %v425
  %v427 = vextract.high.u32 %v425
  %v428 = vmul.u32 %v421, %v412
  %v429 = vadd.s32 %v424, %v426
  %vm430 = vc.u32 %v424, %v426
  %v431 = vadd.s32 %v427, 1
  %v432 = vsel %vm430, %v431, %v427
  %v433 = vadd.s32 %v428, %v432
  %v434 = vadd.s32 %v433, 536870912
  %v435 = vshrl.u32 %v434, 30
  %v436 = vshll.u32 %v435, 30
  %v437 = vsub.s32 %v433, %v436
  %vm438 = vcmp.lt.s32.totalorder %v437, 0
  %v439 = vsub.s32 0, %v437
  %v440 = vsel %vm438, %v439, %v437
  %v441 = vclz %v440
  %v442 = vsub.s32 %v441, 2
  %vm443 = vcmp.gt.s32.totalorder 0, %v442
  %v444 = vsel %vm443, 0, %v442
  %v445 = vsub.s32 32, %v444
  %v446 = vshll.u32 %v437, %v444
  %v447 = vshrl.u32 %v429, %v445
  %v448 = vor.u32 %v446, %v447
  %v449 = vsub.s32 4294967266, %v444
  %v450 = vadd.s32 %v449, 127
  %v451 = vshll.u32 %v450, 23
  %v452 = vor.u32 4788187, %v451
  %v453 = vand.u32 2147483647, %v452
  %v455 = vcvt.s32.f32 %v448
  %v456 = vmul.f32 %v455, %v453
  %v457 = vxor.u32 %v456, 2147483648
  %v458 = vsel %vm375, %v457, %v456
  %v459 = vsub.s32 4, %v435
  %v460 = vsel %vm375, %v459, %v435
  %v461 = vsel %vm374, %v61, %v458
  %v462 = vsel %vm374, 0, %v460
  %v463 = vcosq.f32.pop %v461
  %v464 = vsinq.f32.pop %v461
  %vm465 = vweird.f32 %v61
  %v466 = vand.u32 %v462, 3
  %vm467 = vcmp.lt.s32.totalorder %v466, 2
  %vm468 = vcmp.eq.s32.totalorder %v466, 0
  %v469 = vxor.u32 %v464, 2147483648
  %v470 = vsel %vm468, %v463, %v469
  %vm471 = vcmp.eq.s32.totalorder %v466, 2
  %v472 = vxor.u32 %v463, 2147483648
  %v473 = vsel %vm471, %v472, %v464
  %v474 = vsel %vm467, %v470, %v473
  %v475 = vsel %vm465, nan, %v474
  %v476 = vld [vmem:[%s2] sm:$0xf]
  %v477 = vld [vmem:[%s2 + $0x4] sm:$0xf]
  %v478 = vld [vmem:[%s2 + $0x8] sm:$0xf]
  %v479 = vld [vmem:[%s2 + $0xc] sm:$0xf]
  %v480 = vpack.c.bf16 %v165, %v27
  %v481 = vpack.c.bf16 %v372, %v269
  %v482 = vpack.c.bf16 %v475, %v475
  %v483 = vld [vmem:[%s3] sm:$0xff]
  %v484 = vld [vmem:[%s3 + $0x8] sm:$0xff]
  %v485 = vld [vmem:[%s3 + $0x10] sm:$0xff]
  %v486 = vld [vmem:[%s3 + $0x18] sm:$0xff]
  %488 = vset.pattern.permute.xlu0 0
  %489 = vperm.xlu0 %488, %v483
  %v490 = vpop.permute.xlu0 %489
  %493 = vset.pattern.permute.xlu0 0
  %494 = vperm.xlu0 %493, %v484
  %v495 = vpop.permute.xlu0 %494
  %498 = vset.pattern.permute.xlu0 0
  %499 = vperm.xlu0 %498, %v485
  %v500 = vpop.permute.xlu0 %499
  %503 = vset.pattern.permute.xlu0 0
  %504 = vperm.xlu0 %503, %v486
  %v505 = vpop.permute.xlu0 %504
  %v511 = vunpack.c.l.b16 %v476
  %v512 = vunpack.c.l.b16 %v477
  %v513 = vunpack.c.l.b16 %v478
  %v514 = vunpack.c.l.b16 %v479
  %v515 = vpack.c.b16 %v512, %v511
  %v516 = vpack.c.b16 %v514, %v513
  %vm517 = vcmask 326656
  %v519 = vsel %vm517, %v515, 0
  %v522 = vsel %vm517, %v516, 0
  %vm524 = vcmask 1043456
  %v526 = vsel %vm524, %v482, 0
  %528 = vmatprep.subr.bf16.mxu0 0
  %529 = vmatpush1.bf16.msra.mxu0 %v480
  %530 = vmatprep.subr.bf16.mxu0 0
  %531 = vmatpush1.bf16.msra.mxu0 %v481
  %532 = vmatprep.subr.bf16.mxu0 0
  %533 = vmatpush1.bf16.msra.mxu0 %v526
  %534 = vmatprep.subr.bf16.mxu0 0
  %535 = vmatpush1.bf16.msra.mxu0 0
  %536 = vmatprep.subr.bf16.mxu0 0
  %537 = vmatpush1.bf16.msra.mxu0 0
  %538 = vmatprep.subr.bf16.mxu0 0
  %539 = vmatpush1.bf16.msra.mxu0 0
  %540 = vmatprep.subr.bf16.mxu0 0
  %541 = vmatpush1.bf16.msra.mxu0 0
  %542 = vmatprep.subr.bf16.mxu0 0
  %543 = vmatpush1.bf16.msra.mxu0 0
  %544 = vmatprep.subr.bf16.mxu0 0
  %545 = vmatpush1.bf16.msra.mxu0 0
  %546 = vmatprep.subr.bf16.mxu0 0
  %547 = vmatpush1.bf16.msra.mxu0 0
  %548 = vmatprep.subr.bf16.mxu0 0
  %549 = vmatpush1.bf16.msra.mxu0 0
  %550 = vmatprep.subr.bf16.mxu0 0
  %551 = vmatpush1.bf16.msra.mxu0 0
  %552 = vmatprep.subr.bf16.mxu0 0
  %553 = vmatpush1.bf16.msra.mxu0 0
  %554 = vmatprep.subr.bf16.mxu0 0
  %555 = vmatpush1.bf16.msra.mxu0 0
  %556 = vmatprep.subr.bf16.mxu0 0
  %557 = vmatpush1.bf16.msra.mxu0 0
  %558 = vmatprep.subr.bf16.mxu0 0
  %559 = vmatpush1.bf16.msra.mxu0 0
  %560 = vmatprep.mubr.bf16.mxu0 0
  %561 = vmatmul.mubr.bf16.gmra.mrb[0].mxu0 %v519
  %v562 = vpop.f32.mrb[0].mxu0
  %v563 = vadd.f32 %v490, %v562
  %v564 = vpop.f32.mrb[0].mxu0
  %v565 = vpop.f32.mrb[0].mxu0
  %v566 = vadd.f32 %v495, %v565
  %v567 = vpop.f32.mrb[0].mxu0
  %568 = vmatprep.mubr.bf16.mxu0 0
  %569 = vmatmul.mubr.bf16.gmra.mrb[0].mxu0 %v522
  %v570 = vpop.f32.mrb[0].mxu0
  %v571 = vadd.f32 %v500, %v570
  %v572 = vpop.f32.mrb[0].mxu0
  %v573 = vpop.f32.mrb[0].mxu0
  %v574 = vadd.f32 %v505, %v573
  %v575 = vpop.f32.mrb[0].mxu0
  %576 = vdwg.mxu0
  %v577 = vtanh.pop %v563
  %v578 = vtanh.pop %v566
  %v579 = vtanh.pop %v571
  %v580 = vtanh.pop %v574
  %v581 = vld [vmem:[%s4] sm:$0xf]
  %v582 = vld [vmem:[%s4 + $0x4] sm:$0xf]
  %v583 = vld [vmem:[%s4 + $0x8] sm:$0xf]
  %v584 = vld [vmem:[%s4 + $0xc] sm:$0xf]
  %v585 = vpack.c.bf16 %v578, %v577
  %v586 = vpack.c.bf16 %v580, %v579
  %v587 = vld [vmem:[%s5] sm:$0xff]
  %v588 = vld [vmem:[%s5 + $0x8] sm:$0xff]
  %v589 = vld [vmem:[%s5 + $0x10] sm:$0xff]
  %v590 = vld [vmem:[%s5 + $0x18] sm:$0xff]
  %592 = vset.pattern.permute.xlu0 0
  %593 = vperm.xlu0 %592, %v587
  %v594 = vpop.permute.xlu0 %593
  %597 = vset.pattern.permute.xlu0 0
  %598 = vperm.xlu0 %597, %v588
  %v599 = vpop.permute.xlu0 %598
  %602 = vset.pattern.permute.xlu0 0
  %603 = vperm.xlu0 %602, %v589
  %v604 = vpop.permute.xlu0 %603
  %607 = vset.pattern.permute.xlu0 0
  %608 = vperm.xlu0 %607, %v590
  %v609 = vpop.permute.xlu0 %608
  %v615 = vunpack.c.l.b16 %v581
  %v616 = vunpack.c.l.b16 %v582
  %v617 = vunpack.c.l.b16 %v583
  %v618 = vunpack.c.l.b16 %v584
  %v619 = vpack.c.b16 %v616, %v615
  %v620 = vpack.c.b16 %v618, %v617
  %vm621 = vcmask 261120
  %v623 = vsel %vm621, %v619, 0
  %v626 = vsel %vm621, %v620, 0
  %628 = vmatprep.subr.bf16.mxu0 0
  %629 = vmatpush1.bf16.msra.mxu0 %v585
  %630 = vmatprep.subr.bf16.mxu0 0
  %631 = vmatpush1.bf16.msra.mxu0 %v586
  %632 = vmatprep.subr.bf16.mxu0 0
  %633 = vmatpush1.bf16.msra.mxu0 0
  %634 = vmatprep.subr.bf16.mxu0 0
  %635 = vmatpush1.bf16.msra.mxu0 0
  %636 = vmatprep.subr.bf16.mxu0 0
  %637 = vmatpush1.bf16.msra.mxu0 0
  %638 = vmatprep.subr.bf16.mxu0 0
  %639 = vmatpush1.bf16.msra.mxu0 0
  %640 = vmatprep.subr.bf16.mxu0 0
  %641 = vmatpush1.bf16.msra.mxu0 0
  %642 = vmatprep.subr.bf16.mxu0 0
  %643 = vmatpush1.bf16.msra.mxu0 0
  %644 = vmatprep.subr.bf16.mxu0 0
  %645 = vmatpush1.bf16.msra.mxu0 0
  %646 = vmatprep.subr.bf16.mxu0 0
  %647 = vmatpush1.bf16.msra.mxu0 0
  %648 = vmatprep.subr.bf16.mxu0 0
  %649 = vmatpush1.bf16.msra.mxu0 0
  %650 = vmatprep.subr.bf16.mxu0 0
  %651 = vmatpush1.bf16.msra.mxu0 0
  %652 = vmatprep.subr.bf16.mxu0 0
  %653 = vmatpush1.bf16.msra.mxu0 0
  %654 = vmatprep.subr.bf16.mxu0 0
  %655 = vmatpush1.bf16.msra.mxu0 0
  %656 = vmatprep.subr.bf16.mxu0 0
  %657 = vmatpush1.bf16.msra.mxu0 0
  %658 = vmatprep.subr.bf16.mxu0 0
  %659 = vmatpush1.bf16.msra.mxu0 0
  %660 = vmatprep.mubr.bf16.mxu0 0
  %661 = vmatmul.mubr.bf16.gmra.mrb[0].mxu0 %v623
  %v662 = vpop.f32.mrb[0].mxu0
  %v663 = vadd.f32 %v594, %v662
  %v664 = vpop.f32.mrb[0].mxu0
  %v665 = vpop.f32.mrb[0].mxu0
  %v666 = vadd.f32 %v599, %v665
  %v667 = vpop.f32.mrb[0].mxu0
  %668 = vmatprep.mubr.bf16.mxu0 0
  %669 = vmatmul.mubr.bf16.gmra.mrb[0].mxu0 %v626
  %v670 = vpop.f32.mrb[0].mxu0
  %v671 = vadd.f32 %v604, %v670
  %v672 = vpop.f32.mrb[0].mxu0
  %v673 = vpop.f32.mrb[0].mxu0
  %v674 = vadd.f32 %v609, %v673
  %v675 = vpop.f32.mrb[0].mxu0
  %676 = vdwg.mxu0
  %v677 = vtanh.pop %v663
  %v678 = vtanh.pop %v666
  %v679 = vtanh.pop %v671
  %v680 = vtanh.pop %v674
  %v681 = vld [vmem:[%s6] sm:$0xf]
  %v682 = vpack.c.bf16 %v678, %v677
  %v683 = vpack.c.bf16 %v680, %v679
  %v685 = vsel %vm621, %v681, 0
  %687 = vmatprep.subr.bf16.mxu0 0
  %688 = vmatpush1.bf16.msra.mxu0 %v682
  %689 = vmatprep.subr.bf16.mxu0 0
  %690 = vmatpush1.bf16.msra.mxu0 %v683
  %691 = vmatprep.subr.bf16.mxu0 0
  %692 = vmatpush1.bf16.msra.mxu0 0
  %693 = vmatprep.subr.bf16.mxu0 0
  %694 = vmatpush1.bf16.msra.mxu0 0
  %695 = vmatprep.subr.bf16.mxu0 0
  %696 = vmatpush1.bf16.msra.mxu0 0
  %697 = vmatprep.subr.bf16.mxu0 0
  %698 = vmatpush1.bf16.msra.mxu0 0
  %699 = vmatprep.subr.bf16.mxu0 0
  %700 = vmatpush1.bf16.msra.mxu0 0
  %701 = vmatprep.subr.bf16.mxu0 0
  %702 = vmatpush1.bf16.msra.mxu0 0
  %703 = vmatprep.subr.bf16.mxu0 0
  %704 = vmatpush1.bf16.msra.mxu0 0
  %705 = vmatprep.subr.bf16.mxu0 0
  %706 = vmatpush1.bf16.msra.mxu0 0
  %707 = vmatprep.subr.bf16.mxu0 0
  %708 = vmatpush1.bf16.msra.mxu0 0
  %709 = vmatprep.subr.bf16.mxu0 0
  %710 = vmatpush1.bf16.msra.mxu0 0
  %711 = vmatprep.subr.bf16.mxu0 0
  %712 = vmatpush1.bf16.msra.mxu0 0
  %713 = vmatprep.subr.bf16.mxu0 0
  %714 = vmatpush1.bf16.msra.mxu0 0
  %715 = vmatprep.subr.bf16.mxu0 0
  %716 = vmatpush1.bf16.msra.mxu0 0
  %717 = vmatprep.subr.bf16.mxu0 0
  %718 = vmatpush1.bf16.msra.mxu0 0
  %719 = vmatprep.mubr.bf16.mxu0 0
  %720 = vmatmul.mubr.bf16.gmra.mrb[0].mxu0 %v685
  %v721 = vpop.f32.mrb[0].mxu0
  %v722 = vadd.f32 0.0, %v721
  %v723 = vpop.f32.mrb[0].mxu0
  %v724 = vpop.f32.mrb[0].mxu0
  %v725 = vpop.f32.mrb[0].mxu0
  %726 = vdwg.mxu0
  %727 = vst [vmem:[%s7] sm:$0xff] %v722
  // Predicated region
  $region30: #{_forward_impl.1} parent=0 // pred_check
    _
  $region31: #{_forward_impl.1} parent=0 // pred_check_branch
    %729 = sbr.rel (0) target = $region33
  $region32: #{_forward_impl.1} parent=0 // pred_region
    _
  $region33: #{_forward_impl.1} parent=0 // pred_fallthru
    _
  // Predicated region
  $region34: #{_forward_impl.1} parent=0 // pred_check
    _
  $region35: #{_forward_impl.1} parent=0 // pred_check_branch
    %731 = sbr.rel (0) target = $region37
  $region36: #{_forward_impl.1} parent=0 // pred_region
    _
  $region37: #{_forward_impl.1} parent=0 // pred_fallthru
    _

</llo_original>
